<compile_context>
chip_gen: v7x
topology: tpu7x:2x2x1
jax: 0.10.0
libtpu: 0.0.40
codegen_flags: <defaults>
</compile_context>

<pallas_src>
import jax
import jax.numpy as jnp
from jax import lax
from jax.experimental import pallas as pl
from jax.experimental.pallas import tpu as pltpu

IMAGENET_MEAN = (0.485, 0.456, 0.406)
IMAGENET_STD = (0.229, 0.224, 0.225)


def _round_up(x, m):
    return ((x + m - 1) // m) * m


# --------------------------------------------------------------------------- #
# Kernel
# --------------------------------------------------------------------------- #
def _make_encoder_kernel(f_blk, p, k, d, p_chunk):
    """(F,P,K) bf16 patches x (K,D) bf16 folded weights -> (F,D) f32 pooled feats.

    P is processed in chunks of `p_chunk` rows; each chunk does one frame-batched
    MXU matmul with f32 accumulation, bias + ReLU, and a cross-sublane (XLU)
    partial pool accumulated into an (F, D) f32 VMEM scratch. Output written once.
    """
    n_chunks = p // p_chunk
    inv_p = 1.0 / p

    def kernel(patch_ref, w_ref, b_ref, out_ref, acc_ref):
        w = w_ref[...]                      # (K, D) bf16, resident across the grid
        b = b_ref[...]                      # (1, D) f32 folded bias
        acc_ref[...] = jnp.zeros_like(acc_ref)

        def body(ci, carry):
            start = pl.multiple_of(ci * p_chunk, p_chunk)
            # (F, chunk, K) -> (F*chunk, K): copy-free when chunk % 16 == 0 (bf16).
            x = patch_ref[:, pl.ds(start, p_chunk), :].reshape(f_blk * p_chunk, k)
            h = jnp.dot(x, w, preferred_element_type=jnp.float32)   # MXU, f32 acc
            h = jnp.maximum(h + b, 0.0)                             # bias + ReLU (VALU)
            # Per-frame partial pool: cross-sublane sum runs on the XLU slot.
            acc_ref[...] += jnp.sum(h.reshape(f_blk, p_chunk, d), axis=1)
            return carry

        lax.fori_loop(0, n_chunks, body, 0, unroll=n_chunks <= 4)
        out_ref[...] = acc_ref[...] * inv_p                         # single dense store

    return kernel


# --------------------------------------------------------------------------- #
# Sizing helpers
# --------------------------------------------------------------------------- #
def _vmem_budget():
    """Generation-aware (sizing budget, per-core VMEM request ceiling)."""
    try:
        cap = pltpu.get_tpu_info().vmem_capacity_bytes
    except Exception:
        cap = 64 << 20                     # assume smallest: v7x = 64 MiB / TensorCore
    if cap >= (100 << 20):                 # v5e / v6e: 128 MiB VMEM
        return 72 << 20, 100 << 20
    return 24 << 20, 52 << 20              # v7x: leave headroom in 64 MiB / TC


def _choose_p_chunk(p, max_chunk=512):
    """Largest divisor of P <= max_chunk, preferring x16 (bf16 sublane) alignment
    so the in-kernel (F, chunk, K) -> (F*chunk, K) reshape is copy-free."""
    if p <= max_chunk:
        return p
    divs = [c for c in range(1, max_chunk + 1) if p % c == 0]
    aligned = [c for c in divs if c % 16 == 0]
    return max(aligned) if aligned else max(divs)


def _choose_frames_per_block(n_pad, p, k, d, p_chunk, budget_bytes):
    """Largest sublane-aligned F (multiple of 8 dividing n_pad) whose PADDED
    on-chip footprint fits the budget; prefers an even grid with >= 4 steps
    (>= 2 per v7x TensorCore)."""
    p_pad = _round_up(p, 16)               # bf16 sublane tile of the patch block
    k_pad = _round_up(k, 128)              # lane padding of K (48 -> 128)
    d_pad = _round_up(d, 128)              # lane padding of D

    # Resident (single-buffered, Buffered(1)) folded weights + bias.
    fixed = _round_up(k, 16) * d_pad * 2 + 8 * d_pad * 4
    per_frame = (
        2 * p_pad * k_pad * 2              # double-buffered bf16 patch block
        + 2 * d_pad * 4                    # double-buffered f32 output block
        + d_pad * 4                        # f32 pooled-accumulator scratch
        + p_chunk * d_pad * 4              # live f32 activation chunk
        + p_chunk * k_pad * 2              # sliced bf16 patch chunk
    )

    cands = [f for f in range(8, n_pad + 1, 8) if n_pad % f == 0] or [n_pad]

    def fits(f):
        return fixed + f * per_frame <= budget_bytes

    def rank(f):
        g = n_pad // f
        if not fits(f):
            return (0, 0, 0, 0, -f)        # nothing fits: take the smallest F
        return (1, int(g >= 2), int(g % 2 == 0), int(g >= 4), f)

    f_blk = max(cands, key=rank)
    return f_blk, fixed + f_blk * per_frame


def _resident_spec(block_shape, index_map):
    """Grid-invariant operand: request a single VMEM buffer (no double-buffering)."""
    try:
        return pl.BlockSpec(block_shape, index_map, pipeline_mode=pl.Buffered(1))
    except (TypeError, AttributeError):    # older jax without pipeline_mode
        return pl.BlockSpec(block_shape, index_map)


# --------------------------------------------------------------------------- #
# Wrapper (VisualEncoder.forward)
# --------------------------------------------------------------------------- #
def _extract_patches(x_nchw, k):
    # NCHW -> (N, P, C*k*k): non-overlapping k x k patches, channel-major per patch.
    n, c, h, w = x_nchw.shape
    x = x_nchw.reshape(n, c, h // k, k, w // k, k)
    x = x.transpose(0, 2, 4, 1, 3, 5)                 # (N, H/k, W/k, C, k, k)
    return x.reshape(n, (h // k) * (w // k), c * k * k)


def visual_encoder(frames, w, patch=4):
    """frames: (B, T, C, H, W) or (N, C, H, W) float32, NCHW per frame.
    w: (C*patch*patch, D) float32 synthetic patch-embedding weights."""
    stacked = frames.ndim == 5
    fs = frames.shape
    if stacked:
        frames = frames.reshape(fs[0] * fs[1], fs[2], fs[3], fs[4])
    n, c, h, wd = frames.shape
    assert h % patch == 0 and wd % patch == 0
    p = (h // patch) * (wd // patch)
    k = c * patch * patch
    d = w.shape[1]

    # Fold ImageNet normalization into the weights (exact in f32):
    #   ((x - mean) * inv_std) @ W == x @ (inv_std[:,None] * W) + (-(mean*inv_std) @ W)
    # NOTE: raw pixels are then carried in bf16; ~0.5-1% error vs f32 preprocessing,
    # well inside this script's tolerance.
    mean = jnp.repeat(jnp.asarray(IMAGENET_MEAN, jnp.float32), patch * patch)       # (K,)
    inv_std = 1.0 / jnp.repeat(jnp.asarray(IMAGENET_STD, jnp.float32), patch * patch)
    w_f32 = w.astype(jnp.float32)
    w_folded = (inv_std[:, None] * w_f32).astype(jnp.bfloat16)                      # (K, D) bf16
    bias = (-(mean * inv_std)[None, :] @ w_f32).astype(jnp.float32)                 # (1, D) f32

    # Cast to bf16 BEFORE the patchify transpose so XLA fuses it into one
    # f32-read / bf16-write copy (halves that pre-kernel HBM round trip).
    patches = _extract_patches(frames.astype(jnp.bfloat16), patch)                  # (N, P, K) bf16

    # Pad N to a multiple of 8 so the (f_blk, D) output block is sublane-aligned
    # (dense, unmasked stores) even for awkward/prime N; padded rows sliced off below.
    n_pad = _round_up(n, 8)
    if n_pad != n:
        patches = jnp.pad(patches, ((0, n_pad - n), (0, 0), (0, 0)))

    p_chunk = _choose_p_chunk(p)
    budget, limit_cap = _vmem_budget()
    f_blk, total_bytes = _choose_frames_per_block(n_pad, p, k, d, p_chunk, budget)
    grid = (n_pad // f_blk,)

    # Derive the VMEM request from the computed padded footprint (+25% slack),
    # capped per generation but never below the estimated usage.
    vmem_limit = max(32 << 20, total_bytes * 5 // 4 + (2 << 20))
    vmem_limit = int(min(vmem_limit, max(limit_cap, total_bytes + (2 << 20))))

    kernel = _make_encoder_kernel(f_blk, p, k, d, p_chunk)

    out = pl.pallas_call(
        kernel,
        out_shape=jax.ShapeDtypeStruct((n_pad, d), jnp.float32),
        grid=grid,
        in_specs=[
            # Whole frames per block -> each block DMA is one contiguous HBM region.
            pl.BlockSpec((f_blk, p, k), lambda i: (i, 0, 0)),
            # Grid-invariant folded weights / bias: single-buffered residents.
            _resident_spec((k, d), lambda i: (0, 0)),
            _resident_spec((1, d), lambda i: (0, 0)),
        ],
        out_specs=pl.BlockSpec((f_blk, d), lambda i: (i, 0)),     # sublane/lane-dense slab
        scratch_shapes=[pltpu.VMEM((f_blk, d), jnp.float32)],     # pooled accumulator
        compiler_params=pltpu.CompilerParams(
            dimension_semantics=("parallel",),
            vmem_limit_bytes=vmem_limit,
        ),
    )(patches, w_folded, bias)

    out = out[:n]
    if stacked:
        out = out.reshape(fs[0], fs[1], d)
    return out


# --------------------------------------------------------------------------- #
# Pure-JAX reference (original forward semantics)
# --------------------------------------------------------------------------- #
def _reference(frames, w, patch=4):
    # normalize -> patch-embed -> ReLU -> global average pool, all in f32.
    stacked = frames.ndim == 5
    fs = frames.shape
    if stacked:
        frames = frames.reshape(fs[0] * fs[1], fs[2], fs[3], fs[4])
    patches = _extract_patches(frames.astype(jnp.float32), patch)
    k = patches.shape[2]
    mean = jnp.repeat(jnp.asarray(IMAGENET_MEAN, jnp.float32), patch * patch).reshape(1, 1, k)
    std = jnp.repeat(jnp.asarray(IMAGENET_STD, jnp.float32), patch * patch).reshape(1, 1, k)
    x = (patches - mean) / std
    h = jnp.maximum(jnp.einsum('npk,kd->npd', x, w.astype(jnp.float32)), 0.0)
    feat = h.mean(axis=1)
    if stacked:
        feat = feat.reshape(fs[0], fs[1], -1)
    return feat


if __name__ == "__main__":
    B, T, C, H, W = 2, 8, 3, 16, 16   # stacked video frames, NCHW per frame (N=16 -> F=8, grid=2)
    PATCH = 4
    K = C * PATCH * PATCH             # 48
    D = 64                            # feature dim (stand-in for 2048)

    key = jax.random.PRNGKey(0)
    k_frames, k_w = jax.random.split(key)
    frames = jax.random.uniform(k_frames, (B, T, C, H, W), dtype=jnp.float32)
    w = jax.random.normal(k_w, (K, D), dtype=jnp.float32) * 0.05

    feats = visual_encoder(frames, w, patch=PATCH)
    feats = jax.block_until_ready(feats)

    ref = _reference(frames, w, patch=PATCH)
    assert feats.shape == (B, T, D), feats.shape
    # Tolerance accounts for bf16 operands (f32 MXU accumulation) vs the f32 reference.
    assert jnp.allclose(feats, ref, rtol=2e-2, atol=2e-2), (
        float(jnp.max(jnp.abs(feats - ref))))

    print("KERNEL_OK")
</pallas_src>

<mosaic_0001>
module attributes {stable_mosaic.version = 11 : i64} {
  func.func @kernel(%arg0: i32, %arg1: memref<8x16x48xbf16, #tpu.memory_space<vmem>>, %arg2: memref<48x64xbf16, #tpu.memory_space<vmem>>, %arg3: memref<1x64xf32, #tpu.memory_space<vmem>>, %arg4: memref<8x64xf32, #tpu.memory_space<vmem>>, %arg5: memref<8x64xf32, #tpu.memory_space<vmem>>) attributes {dimension_semantics = [#tpu.dimension_semantics<parallel>], iteration_bounds = array<i64: 2>, scalar_prefetch = 0 : i64, scratch_operands = 1 : i64, tpu.core_type = #tpu.core_type<tc>, window_params = [{transform_indices = @transform_0, window_bounds = array<i64: 8, 16, 48>}, {pipeline_mode = #tpu.pipeline_mode<synchronous>, transform_indices = @transform_1, window_bounds = array<i64: 48, 64>}, {pipeline_mode = #tpu.pipeline_mode<synchronous>, transform_indices = @transform_2, window_bounds = array<i64: 1, 64>}, {transform_indices = @transform_3, window_bounds = array<i64: 8, 64>}]} {
    %c0 = arith.constant 0 : index
    %c0_0 = arith.constant 0 : index
    %0 = vector.load %arg2[%c0, %c0_0] : memref<48x64xbf16, #tpu.memory_space<vmem>>, vector<48x64xbf16>
    %c0_1 = arith.constant 0 : index
    %c0_2 = arith.constant 0 : index
    %1 = vector.load %arg3[%c0_1, %c0_2] : memref<1x64xf32, #tpu.memory_space<vmem>>, vector<1x64xf32>
    %cst = arith.constant 0.000000e+00 : f32
    %2 = vector.broadcast %cst : f32 to vector<8x64xf32>
    %c0_3 = arith.constant 0 : index
    %c0_4 = arith.constant 0 : index
    %3 = vector.load %arg5[%c0_3, %c0_4] : memref<8x64xf32, #tpu.memory_space<vmem>>, vector<8x64xf32>
    tpu.vector_store %arg5[%c0_3, %c0_4], %2 {strides = array<i32>} : memref<8x64xf32, #tpu.memory_space<vmem>>, vector<8x64xf32>,
    %c0_i32 = arith.constant 0 : i32
    %c16_i32 = arith.constant 16 : i32
    %4 = arith.muli %c0_i32, %c16_i32 : i32
    %5 = tpu.assume_multiple %4, 16 : i32
    %c0_5 = arith.constant 0 : index
    %6 = arith.index_cast %5 : i32 to index
    %c0_6 = arith.constant 0 : index
    %7 = vector.load %arg1[%c0_5, %6, %c0_6] : memref<8x16x48xbf16, #tpu.memory_space<vmem>>, vector<8x16x48xbf16>
    %8 = vector.shape_cast %7 : vector<8x16x48xbf16> to vector<128x48xbf16>
    %cst_7 = arith.constant dense<0.000000e+00> : vector<128x64xf32>
    %9 = tpu.matmul %8, %0, %cst_7 {dimension_numbers = #tpu.dot_dimension_numbers<[1], [0], [0], [1], [0, 0, 1, 1], [], []>} : vector<128x48xbf16>, vector<48x64xbf16>, vector<128x64xf32> -> vector<128x64xf32>
    %10 = vector.broadcast %1 : vector<1x64xf32> to vector<128x64xf32>
    %11 = arith.addf %9, %10 : vector<128x64xf32>
    %cst_8 = arith.constant 0.000000e+00 : f32
    %12 = vector.broadcast %cst_8 : f32 to vector<128x64xf32>
    %13 = arith.maximumf %11, %12 : vector<128x64xf32>
    %c0_9 = arith.constant 0 : index
    %c0_10 = arith.constant 0 : index
    %14 = vector.load %arg5[%c0_9, %c0_10] : memref<8x64xf32, #tpu.memory_space<vmem>>, vector<8x64xf32>
    %15 = vector.shape_cast %13 : vector<128x64xf32> to vector<8x16x64xf32>
    %cst_11 = arith.constant dense<0.000000e+00> : vector<8x64xf32>
    %16 = vector.multi_reduction <add>, %15, %cst_11 [1] : vector<8x16x64xf32> to vector<8x64xf32>
    %17 = arith.addf %14, %16 : vector<8x64xf32>
    %c0_12 = arith.constant 0 : index
    %c0_13 = arith.constant 0 : index
    %18 = vector.load %arg5[%c0_12, %c0_13] : memref<8x64xf32, #tpu.memory_space<vmem>>, vector<8x64xf32>
    tpu.vector_store %arg5[%c0_12, %c0_13], %17 {strides = array<i32>} : memref<8x64xf32, #tpu.memory_space<vmem>>, vector<8x64xf32>,
    %c1_i32 = arith.constant 1 : i32
    %c0_14 = arith.constant 0 : index
    %c0_15 = arith.constant 0 : index
    %19 = vector.load %arg5[%c0_14, %c0_15] : memref<8x64xf32, #tpu.memory_space<vmem>>, vector<8x64xf32>
    %cst_16 = arith.constant 6.250000e-02 : f32
    %20 = vector.broadcast %cst_16 : f32 to vector<8x64xf32>
    %21 = arith.mulf %19, %20 : vector<8x64xf32>
    %c0_17 = arith.constant 0 : index
    %c0_18 = arith.constant 0 : index
    %22 = vector.load %arg4[%c0_17, %c0_18] : memref<8x64xf32, #tpu.memory_space<vmem>>, vector<8x64xf32>
    tpu.vector_store %arg4[%c0_17, %c0_18], %21 {strides = array<i32>} : memref<8x64xf32, #tpu.memory_space<vmem>>, vector<8x64xf32>,
    return
  }
  func.func @transform_0(%arg0: i32) -> (i32, i32, i32) {
    %c0_i32 = arith.constant 0 : i32
    %c0_i32_0 = arith.constant 0 : i32
    %c0_i32_1 = arith.constant 0 : i32
    return %arg0, %c0_i32, %c0_i32_0 : i32, i32, i32
  }
  func.func @transform_1(%arg0: i32) -> (i32, i32) {
    %c0_i32 = arith.constant 0 : i32
    %c0_i32_0 = arith.constant 0 : i32
    %c0_i32_1 = arith.constant 0 : i32
    return %c0_i32, %c0_i32_0 : i32, i32
  }
  func.func @transform_2(%arg0: i32) -> (i32, i32) {
    %c0_i32 = arith.constant 0 : i32
    %c0_i32_0 = arith.constant 0 : i32
    %c0_i32_1 = arith.constant 0 : i32
    return %c0_i32, %c0_i32_0 : i32, i32
  }
  func.func @transform_3(%arg0: i32) -> (i32, i32) {
    %c0_i32 = arith.constant 0 : i32
    %c0_i32_0 = arith.constant 0 : i32
    return %arg0, %c0_i32 : i32, i32
  }
}

</mosaic_0001>

<llo_original>
// kernel: tpu_custom_call.1
$region0: #{tpu_custom_call.1}
  #allocation0 [shape = 'u32[]', space=smem, size = 0x4, offset = 0x4, fixed_abs, tag = 'smem constant byte address 0x4 - core index']
  #allocation1 [shape = 'u32[144,128]{1,0:T(1,128)}', space=vmem, size = 0x12000, scoped, tag = 'internal scratch']
  #allocation2 [shape = 'f32[8,64]{1,0:T(8,128)}', space=vmem, size = 0x1000, scoped, tag = 'scratch operand']
  %s0 = inlined_call_operand.hbm [shape: bf16[16,16,48], index: 0, kind: input, shape index: {}]
  %s1 = inlined_call_operand.hbm [shape: bf16[48,64], index: 1, kind: input, shape index: {}]
  %s2 = inlined_call_operand.vmem [shape: f32[1,64], index: 2, kind: input, shape index: {}]
  %s3 = inlined_call_operand.hbm [shape: f32[16,64], index: 3, kind: output, shape index: {}]
  %s4 = sld [smem:[#allocation0]]
  $region53: #{tpu_custom_call.1} parent=0
    _
  %s6 = ssub.s32 1, %s4
  %s7 = scalar_select 0, %s6, %s4
  $region1: #{tpu_custom_call.1} parent=0
    #allocation3 [shape = 'u8[65536]{0}', space=vmem, size = 0x10000, scoped, tag = 'input window, operand 0']
    #allocation4 [shape = 's32[2]{0}', space=sflag, size = 0x8, scoped, tag = 'scoped memory for tpu_custom_call.1']
    #allocation5 [shape = 's32[2]{0}', space=sflag, size = 0x8, scoped, tag = 'scoped memory for tpu_custom_call.1']
    #allocation6 [shape = 'u8[12288]{0}', space=vmem, size = 0x3000, scoped, tag = 'input window, operand 1, single buffered']
    #allocation7 [shape = 's32[1]{0}', space=sflag, size = 0x4, scoped, tag = 'scoped memory for tpu_custom_call.1']
    #allocation8 [shape = 'u8[8192]{0}', space=vmem, size = 0x2000, scoped, tag = 'output window, operand 0']
    %8 = vsyncpa [#allocation4], 0
    %s9 = scalar_lea.sflag [#allocation4], 1
    %10 = vsyncpa %s9, 0
    %11 = vsyncpa [#allocation7], 0
    %12 = vsyncpa [#allocation5], 0
    %s13 = scalar_lea.sflag [#allocation5], 1
    %14 = vsyncpa %s13, 0
    loop: start=0, step=1, limit=4
    $region2: #{tpu_custom_call.1} parent=1 // loop_pre_header
      _
    $region3: #{tpu_custom_call.1} parent=1 // loop_header
      %s16 = sphi 0, %s20
      %p17 = scmp.ge.s32.totalorder %s16, 4
      %s26 = sphi 0, %s28
      %s29 = sphi 0, %s26
      %s30 = sphi 0, %s29
      %s46 = sphi 0, %s30
      %s50 = sphi 0, %s50
      %s52 = sphi 0, %s50
      %s53 = sphi 0, %s52
      %s67 = sphi 0, %s53
      %s71 = sphi 0, %s71
      %s73 = sphi 0, %s71
      %s74 = sphi 0, %s73
      %s88 = sphi 0, %s74
      %s94 = sphi 0, %s96
      %s97 = sphi 0, %s94
      %s98 = sphi 0, %s97
      %s114 = sphi 0, %s98
    $region4: #{tpu_custom_call.1} parent=1 // loop_header_branch
      %19 = sbr.rel (%p17) target = $region8
    $region5: #{tpu_custom_call.1} parent=1 // loop_body
      %s21 = ssub.s32 %s16, 1
      %s22 = ssub.s32 %s16, 2
      %s23 = sadd.s32 %s16, 1
      %s24 = ssub.s32 %s16, %s23
      %p25 = scmp.eq.s32.totalorder %s24, 0
      %s27 = sadd.s32 %s26, 1
      %s28 = scalar_select %p25, %s26, %s27
      %p31 = pneg %p25
      %p32 = scmp.eq.s32.totalorder %s16, 1
      %p33 = por %p31, %p32
      %p34 = scmp.ne.s32.totalorder %s26, %s29
      %p35 = scmp.eq.s32.totalorder %s16, 0
      %p36 = por %p34, %p35
      %p37 = scmp.ne.s32.totalorder %s26, %s29
      %p38 = scmp.eq.s32.totalorder %s21, 1
      %p39 = por %p37, %p38
      %p40 = scmp.ne.s32.totalorder %s29, %s30
      %p41 = scmp.eq.s32.totalorder %s21, 0
      %p42 = por %p40, %p41
      %p43 = scmp.ne.s32.totalorder %s29, %s30
      %p44 = scmp.eq.s32.totalorder %s22, 1
      %p45 = por %p43, %p44
      %p47 = scmp.ne.s32.totalorder %s30, %s46
      %p48 = scmp.eq.s32.totalorder %s22, 0
      %p49 = por %p47, %p48
      %s51 = sadd.s32 %s50, 1
      %p54 = scmp.eq.s32.totalorder %s16, 1
      %p55 = scmp.ne.s32.totalorder %s50, %s52
      %p56 = scmp.eq.s32.totalorder %s16, 0
      %p57 = por %p55, %p56
      %p58 = scmp.ne.s32.totalorder %s50, %s52
      %p59 = scmp.eq.s32.totalorder %s21, 1
      %p60 = por %p58, %p59
      %p61 = scmp.ne.s32.totalorder %s52, %s53
      %p62 = scmp.eq.s32.totalorder %s21, 0
      %p63 = por %p61, %p62
      %p64 = scmp.ne.s32.totalorder %s52, %s53
      %p65 = scmp.eq.s32.totalorder %s22, 1
      %p66 = por %p64, %p65
      %p68 = scmp.ne.s32.totalorder %s53, %s67
      %p69 = scmp.eq.s32.totalorder %s22, 0
      %p70 = por %p68, %p69
      %s72 = sadd.s32 %s71, 1
      %p75 = scmp.eq.s32.totalorder %s16, 1
      %p76 = scmp.ne.s32.totalorder %s71, %s73
      %p77 = scmp.eq.s32.totalorder %s16, 0
      %p78 = por %p76, %p77
      %p79 = scmp.ne.s32.totalorder %s71, %s73
      %p80 = scmp.eq.s32.totalorder %s21, 1
      %p81 = por %p79, %p80
      %p82 = scmp.ne.s32.totalorder %s73, %s74
      %p83 = scmp.eq.s32.totalorder %s21, 0
      %p84 = por %p82, %p83
      %p85 = scmp.ne.s32.totalorder %s73, %s74
      %p86 = scmp.eq.s32.totalorder %s22, 1
      %p87 = por %p85, %p86
      %p89 = scmp.ne.s32.totalorder %s74, %s88
      %p90 = scmp.eq.s32.totalorder %s22, 0
      %p91 = por %p89, %p90
      %s92 = ssub.s32 %s16, %s23
      %p93 = scmp.eq.s32.totalorder %s92, 0
      %s95 = sadd.s32 %s94, 1
      %s96 = scalar_select %p93, %s94, %s95
      %p99 = pneg %p93
      %p100 = scmp.eq.s32.totalorder %s16, 1
      %p101 = por %p99, %p100
      %p102 = scmp.ne.s32.totalorder %s94, %s97
      %p103 = scmp.eq.s32.totalorder %s16, 0
      %p104 = por %p102, %p103
      %p105 = scmp.ne.s32.totalorder %s94, %s97
      %p106 = scmp.eq.s32.totalorder %s21, 1
      %p107 = por %p105, %p106
      %p108 = scmp.ne.s32.totalorder %s97, %s98
      %p109 = scmp.eq.s32.totalorder %s21, 0
      %p110 = por %p108, %p109
      %p111 = scmp.ne.s32.totalorder %s97, %s98
      %p112 = scmp.eq.s32.totalorder %s22, 1
      %p113 = por %p111, %p112
      %p115 = scmp.ne.s32.totalorder %s98, %s114
      %p116 = scmp.eq.s32.totalorder %s22, 0
      %p117 = por %p115, %p116
      %p118 = scmp.le.s32.totalorder 1, %s16
      %p119 = scmp.lt.s32.totalorder %s16, 3
      %p120 = pnand %p118, %p119
      %p121 = pneg %p120
      // Predicated region
      $region9: #{tpu_custom_call.1} parent=5 // pred_check
        _
      $region10: #{tpu_custom_call.1} parent=5 // pred_check_branch
        %123 = sbr.rel (%p120) target = $region12
      $region11: #{tpu_custom_call.1} parent=5 // pred_region
        %s124 = ssub.s32 %s16, 1
        // Predicated region
        $region13: #{tpu_custom_call.1} parent=11 // pred_check
          %p125 = pneg %p63
        $region14: #{tpu_custom_call.1} parent=11 // pred_check_branch
          %127 = sbr.rel (%p125) target = $region16
        $region15: #{tpu_custom_call.1} parent=11 // pred_region
          %s129 = ssub.s32 384, 384
          %130 = vsyncadd [#allocation7], %s129
          %s131 = sshll.u32 [#allocation6], 4
          %s132 = int_to_ptr.vmem [resolvable:$true] %s131
          %137 = dma.hbm_to_vmem [thread:$0]  %s1, 384, %s132, [#allocation7], 64, 64, 4
        $region16: #{tpu_custom_call.1} parent=11 // pred_fallthru
          _
        // Predicated region
        $region17: #{tpu_custom_call.1} parent=11 // pred_check
          %p138 = pneg %p84
        $region18: #{tpu_custom_call.1} parent=11 // pred_check_branch
          %140 = sbr.rel (%p138) target = $region20
        $region19: #{tpu_custom_call.1} parent=11 // pred_region
          _
        $region20: #{tpu_custom_call.1} parent=11 // pred_fallthru
          _
      $region12: #{tpu_custom_call.1} parent=5 // pred_fallthru
        _
      %p141 = scmp.lt.s32.totalorder %s16, 2
      // Predicated region
      $region21: #{tpu_custom_call.1} parent=5 // pred_check
        %p142 = pneg %p141
      $region22: #{tpu_custom_call.1} parent=5 // pred_check_branch
        %144 = sbr.rel (%p142) target = $region24
      $region23: #{tpu_custom_call.1} parent=5 // pred_region
        // Predicated region
        $region25: #{tpu_custom_call.1} parent=23 // pred_check
          %p145 = pneg %p36
        $region26: #{tpu_custom_call.1} parent=23 // pred_check_branch
          %147 = sbr.rel (%p145) target = $region28
        $region27: #{tpu_custom_call.1} parent=23 // pred_region
          %s148 = sand.u32 %s26, 1
          %s149 = scalar_lea.sflag [#allocation4], %s148
          %s150 = sand.u32 %s26, 1
          %s151 = smul.addr %s150, 64
          %s152 = scalar_lea.vmem [#allocation3], %s151
          %s153 = smul.u32 8, %s16
          %s155 = ssub.s32 1024, 1024
          %156 = vsyncadd %s149, %s155
          %s157 = smul.addr %s153, 2
          %s158 = smul.addr %s157, 64
          %s159 = scalar_lea.hbm %s0, %s158
          %s160 = sshll.u32 %s152, 4
          %s161 = int_to_ptr.vmem [resolvable:$true] %s160
          %166 = dma.hbm_to_vmem [thread:$0]  %s159, 1024, %s161, %s149, 64, 64, 4
        $region28: #{tpu_custom_call.1} parent=23 // pred_fallthru
          _
      $region24: #{tpu_custom_call.1} parent=5 // pred_fallthru
        _
      %p167 = scmp.le.s32.totalorder 1, %s16
      %p168 = scmp.lt.s32.totalorder %s16, 3
      %p169 = pnand %p167, %p168
      %p170 = pneg %p169
      // Predicated region
      $region29: #{tpu_custom_call.1} parent=5 // pred_check
        _
      $region30: #{tpu_custom_call.1} parent=5 // pred_check_branch
        %172 = sbr.rel (%p169) target = $region32
      $region31: #{tpu_custom_call.1} parent=5 // pred_region
        %s173 = ssub.s32 %s16, 1
        %s174 = sand.u32 %s29, 1
        %s175 = scalar_lea.sflag [#allocation4], %s174
        %s176 = sand.u32 %s29, 1
        %s177 = smul.addr %s176, 64
        %s178 = scalar_lea.vmem [#allocation3], %s177
        // Predicated region
        $region33: #{tpu_custom_call.1} parent=31 // pred_check
          %p179 = pneg %p42
        $region34: #{tpu_custom_call.1} parent=31 // pred_check_branch
          %181 = sbr.rel (%p179) target = $region36
        $region35: #{tpu_custom_call.1} parent=31 // pred_region
          %182 = dma.done %s175, 1024
        $region36: #{tpu_custom_call.1} parent=31 // pred_fallthru
          _
        // Predicated region
        $region37: #{tpu_custom_call.1} parent=31 // pred_check
          %p183 = pneg %p63
        $region38: #{tpu_custom_call.1} parent=31 // pred_check_branch
          %185 = sbr.rel (%p183) target = $region40
        $region39: #{tpu_custom_call.1} parent=31 // pred_region
          %186 = dma.done [#allocation7], 384
        $region40: #{tpu_custom_call.1} parent=31 // pred_fallthru
          _
        %s187 = sand.u32 %s29, 1
        %s188 = scalar_lea.sflag [#allocation4], %s187
        %s189 = sand.u32 %s29, 1
        %s190 = smul.addr %s189, 64
        %s191 = scalar_lea.vmem [#allocation3], %s190
        %p192 = pneg %p42
        %p193 = pneg %p39
        %p194 = pneg %p63
        %p195 = pneg %p60
        %p196 = pneg %p84
        %p197 = pneg %p81
        %p198 = pneg %p110
        %p199 = pneg %p107
        %s200 = sand.u32 %s97, 1
        %s201 = scalar_lea.sflag [#allocation5], %s200
        %s202 = sand.u32 %s97, 1
        %s203 = smul.addr %s202, 8
        %s204 = scalar_lea.vmem [#allocation8], %s203
        %s205 = smul.u32 8, %s21
        %v207 = vld [vmem:[#allocation6] sm:$0xf]
        %v208 = vld [vmem:[#allocation6 + $0x4] sm:$0xf]
        %v209 = vld [vmem:[#allocation6 + $0x8] sm:$0xf]
        %v210 = vld [vmem:[#allocation6 + $0xc] sm:$0xf]
        %v211 = vld [vmem:[#allocation6 + $0x10] sm:$0xf]
        %v212 = vld [vmem:[#allocation6 + $0x14] sm:$0xf]
        %v213 = vld [vmem:[%s2] sm:$0x1]
        %vm214 = vcmask 523264
        %215 = vst.msk [vmem:[#allocation2] sm:$0xff] %vm214, 0.0
        %v216 = vld [vmem:[%s178] sm:$0xf]
        %v217 = vld [vmem:[%s178 + $0x4] sm:$0xf]
        %v218 = vld [vmem:[%s178 + $0x8] sm:$0xf]
        %v219 = vld [vmem:[%s178 + $0xc] sm:$0xf]
        %v220 = vld [vmem:[%s178 + $0x10] sm:$0xf]
        %v221 = vld [vmem:[%s178 + $0x14] sm:$0xf]
        %v222 = vld [vmem:[%s178 + $0x18] sm:$0xf]
        %v223 = vld [vmem:[%s178 + $0x1c] sm:$0xf]
        %v224 = vld [vmem:[%s178 + $0x20] sm:$0xf]
        %v225 = vld [vmem:[%s178 + $0x24] sm:$0xf]
        %v226 = vld [vmem:[%s178 + $0x28] sm:$0xf]
        %v227 = vld [vmem:[%s178 + $0x2c] sm:$0xf]
        %v228 = vld [vmem:[%s178 + $0x30] sm:$0xf]
        %v229 = vld [vmem:[%s178 + $0x34] sm:$0xf]
        %v230 = vld [vmem:[%s178 + $0x38] sm:$0xf]
        %v231 = vld [vmem:[%s178 + $0x3c] sm:$0xf]
        %v233 = vlaneseq
        %v234 = vshrl.u32 %v233, 7
        %v235 = vsub.s32 0, %v234
        %v236 = vrot.slane %v213, %v235
        %v254 = vunpack.c.l.b16 %v216
        %v255 = vunpack.c.l.b16 %v217
        %v256 = vunpack.c.l.b16 %v218
        %v257 = vunpack.c.l.b16 %v219
        %v258 = vunpack.c.l.b16 %v220
        %v259 = vunpack.c.l.b16 %v221
        %v260 = vunpack.c.l.b16 %v222
        %v261 = vunpack.c.l.b16 %v223
        %v262 = vunpack.c.l.b16 %v224
        %v263 = vunpack.c.l.b16 %v225
        %v264 = vunpack.c.l.b16 %v226
        %v265 = vunpack.c.l.b16 %v227
        %v266 = vunpack.c.l.b16 %v228
        %v267 = vunpack.c.l.b16 %v229
        %v268 = vunpack.c.l.b16 %v230
        %v269 = vunpack.c.l.b16 %v231
        %v270 = vpack.c.b16 %v255, %v254
        %v271 = vpack.c.b16 %v257, %v256
        %v272 = vpack.c.b16 %v259, %v258
        %v273 = vpack.c.b16 %v261, %v260
        %v274 = vpack.c.b16 %v263, %v262
        %v275 = vpack.c.b16 %v265, %v264
        %v276 = vpack.c.b16 %v267, %v266
        %v277 = vpack.c.b16 %v269, %v268
        %v284 = vunpack.c.l.b16 %v207
        %v285 = vunpack.c.l.b16 %v208
        %v286 = vunpack.c.l.b16 %v209
        %v287 = vunpack.c.l.b16 %v210
        %v288 = vunpack.c.l.b16 %v211
        %v289 = vunpack.c.l.b16 %v212
        %v290 = vpack.c.b16 %v285, %v284
        %v291 = vpack.c.b16 %v287, %v286
        %v292 = vpack.c.b16 %v289, %v288
        %vm296 = vcmask 392192
        %v298 = vsel %vm296, %v270, 0
        %v301 = vsel %vm296, %v271, 0
        %v304 = vsel %vm296, %v272, 0
        %v307 = vsel %vm296, %v273, 0
        %v310 = vsel %vm296, %v274, 0
        %v313 = vsel %vm296, %v275, 0
        %v316 = vsel %vm296, %v276, 0
        %v319 = vsel %vm296, %v277, 0
        %321 = vmatprep.subr.bf16.mxu0 0
        %322 = vmatpush1.bf16.msra.mxu0 %v290
        %323 = vmatprep.subr.bf16.mxu0 0
        %324 = vmatpush1.bf16.msra.mxu0 %v291
        %325 = vmatprep.subr.bf16.mxu0 0
        %326 = vmatpush1.bf16.msra.mxu0 %v292
        %327 = vmatprep.subr.bf16.mxu0 0
        %328 = vmatpush1.bf16.msra.mxu0 0
        %329 = vmatprep.subr.bf16.mxu0 0
        %330 = vmatpush1.bf16.msra.mxu0 0
        %331 = vmatprep.subr.bf16.mxu0 0
        %332 = vmatpush1.bf16.msra.mxu0 0
        %333 = vmatprep.subr.bf16.mxu0 0
        %334 = vmatpush1.bf16.msra.mxu0 0
        %335 = vmatprep.subr.bf16.mxu0 0
        %336 = vmatpush1.bf16.msra.mxu0 0
        %337 = vmatprep.subr.bf16.mxu0 0
        %338 = vmatpush1.bf16.msra.mxu0 0
        %339 = vmatprep.subr.bf16.mxu0 0
        %340 = vmatpush1.bf16.msra.mxu0 0
        %341 = vmatprep.subr.bf16.mxu0 0
        %342 = vmatpush1.bf16.msra.mxu0 0
        %343 = vmatprep.subr.bf16.mxu0 0
        %344 = vmatpush1.bf16.msra.mxu0 0
        %345 = vmatprep.subr.bf16.mxu0 0
        %346 = vmatpush1.bf16.msra.mxu0 0
        %347 = vmatprep.subr.bf16.mxu0 0
        %348 = vmatpush1.bf16.msra.mxu0 0
        %349 = vmatprep.subr.bf16.mxu0 0
        %350 = vmatpush1.bf16.msra.mxu0 0
        %351 = vmatprep.subr.bf16.mxu0 0
        %352 = vmatpush1.bf16.msra.mxu0 0
        %353 = vmatprep.mubr.bf16.mxu0 0
        %354 = vmatmul.mubr.bf16.gmra.mrb[0].mxu0 %v298
        %v355 = vpop.f32.mrb[0].mxu0
        %v356 = vadd.f32 %v236, %v355
        %v357 = vpop.f32.mrb[0].mxu0
        %v358 = vpop.f32.mrb[0].mxu0
        %v359 = vadd.f32 %v236, %v358
        %v360 = vpop.f32.mrb[0].mxu0
        %361 = vmatprep.mubr.bf16.mxu0 0
        %362 = vmatmul.mubr.bf16.gmra.mrb[0].mxu0 %v301
        %v363 = vpop.f32.mrb[0].mxu0
        %v364 = vadd.f32 %v236, %v363
        %v365 = vpop.f32.mrb[0].mxu0
        %v366 = vpop.f32.mrb[0].mxu0
        %v367 = vadd.f32 %v236, %v366
        %v368 = vpop.f32.mrb[0].mxu0
        %369 = vmatprep.mubr.bf16.mxu0 0
        %370 = vmatmul.mubr.bf16.gmra.mrb[0].mxu0 %v304
        %v371 = vpop.f32.mrb[0].mxu0
        %v372 = vadd.f32 %v236, %v371
        %v373 = vpop.f32.mrb[0].mxu0
        %v374 = vpop.f32.mrb[0].mxu0
        %v375 = vadd.f32 %v236, %v374
        %v376 = vpop.f32.mrb[0].mxu0
        %377 = vmatprep.mubr.bf16.mxu0 0
        %378 = vmatmul.mubr.bf16.gmra.mrb[0].mxu0 %v307
        %v379 = vpop.f32.mrb[0].mxu0
        %v380 = vadd.f32 %v236, %v379
        %v381 = vpop.f32.mrb[0].mxu0
        %v382 = vpop.f32.mrb[0].mxu0
        %v383 = vadd.f32 %v236, %v382
        %v384 = vpop.f32.mrb[0].mxu0
        %385 = vmatprep.mubr.bf16.mxu0 0
        %386 = vmatmul.mubr.bf16.gmra.mrb[0].mxu0 %v310
        %v387 = vpop.f32.mrb[0].mxu0
        %v388 = vadd.f32 %v236, %v387
        %v389 = vpop.f32.mrb[0].mxu0
        %v390 = vpop.f32.mrb[0].mxu0
        %v391 = vadd.f32 %v236, %v390
        %v392 = vpop.f32.mrb[0].mxu0
        %393 = vmatprep.mubr.bf16.mxu0 0
        %394 = vmatmul.mubr.bf16.gmra.mrb[0].mxu0 %v313
        %v395 = vpop.f32.mrb[0].mxu0
        %v396 = vadd.f32 %v236, %v395
        %v397 = vpop.f32.mrb[0].mxu0
        %v398 = vpop.f32.mrb[0].mxu0
        %v399 = vadd.f32 %v236, %v398
        %v400 = vpop.f32.mrb[0].mxu0
        %401 = vmatprep.mubr.bf16.mxu0 0
        %402 = vmatmul.mubr.bf16.gmra.mrb[0].mxu0 %v316
        %v403 = vpop.f32.mrb[0].mxu0
        %v404 = vadd.f32 %v236, %v403
        %v405 = vpop.f32.mrb[0].mxu0
        %v406 = vpop.f32.mrb[0].mxu0
        %v407 = vadd.f32 %v236, %v406
        %v408 = vpop.f32.mrb[0].mxu0
        %409 = vmatprep.mubr.bf16.mxu0 0
        %410 = vmatmul.mubr.bf16.gmra.mrb[0].mxu0 %v319
        %v411 = vpop.f32.mrb[0].mxu0
        %v412 = vadd.f32 %v236, %v411
        %v413 = vpop.f32.mrb[0].mxu0
        %v414 = vpop.f32.mrb[0].mxu0
        %v415 = vadd.f32 %v236, %v414
        %v416 = vpop.f32.mrb[0].mxu0
        %417 = vdwg.mxu0
        %v418 = vmax.f32 %v356, 0.0
        %v419 = vmax.f32 %v359, 0.0
        %v420 = vmax.f32 %v364, 0.0
        %v421 = vmax.f32 %v367, 0.0
        %v422 = vmax.f32 %v372, 0.0
        %v423 = vmax.f32 %v375, 0.0
        %v424 = vmax.f32 %v380, 0.0
        %v425 = vmax.f32 %v383, 0.0
        %v426 = vmax.f32 %v388, 0.0
        %v427 = vmax.f32 %v391, 0.0
        %v428 = vmax.f32 %v396, 0.0
        %v429 = vmax.f32 %v399, 0.0
        %v430 = vmax.f32 %v404, 0.0
        %v431 = vmax.f32 %v407, 0.0
        %v432 = vmax.f32 %v412, 0.0
        %v433 = vmax.f32 %v415, 0.0
        %v434 = vld [vmem:[#allocation2] sm:$0xff]
        %v435 = vsel %vm214, %v418, 0.0
        %v436 = vsel %vm214, %v419, 0.0
        %v437 = vadd.f32 %v435, %v436
        %v438 = vrot.slane %v437, 4
        %v439 = vadd.f32 %v437, %v438
        %v440 = vrot.slane %v439, 2
        %v441 = vadd.f32 %v439, %v440
        %v442 = vrot.slane %v441, 1
        %v443 = vadd.f32 %v441, %v442
        %v444 = vsel %vm214, %v420, 0.0
        %v445 = vsel %vm214, %v421, 0.0
        %v446 = vadd.f32 %v444, %v445
        %v447 = vrot.slane %v446, 4
        %v448 = vadd.f32 %v446, %v447
        %v449 = vrot.slane %v448, 2
        %v450 = vadd.f32 %v448, %v449
        %v451 = vrot.slane %v450, 1
        %v452 = vadd.f32 %v450, %v451
        %v453 = vsel %vm214, %v422, 0.0
        %v454 = vsel %vm214, %v423, 0.0
        %v455 = vadd.f32 %v453, %v454
        %v456 = vrot.slane %v455, 4
        %v457 = vadd.f32 %v455, %v456
        %v458 = vrot.slane %v457, 2
        %v459 = vadd.f32 %v457, %v458
        %v460 = vrot.slane %v459, 1
        %v461 = vadd.f32 %v459, %v460
        %v462 = vsel %vm214, %v424, 0.0
        %v463 = vsel %vm214, %v425, 0.0
        %v464 = vadd.f32 %v462, %v463
        %v465 = vrot.slane %v464, 4
        %v466 = vadd.f32 %v464, %v465
        %v467 = vrot.slane %v466, 2
        %v468 = vadd.f32 %v466, %v467
        %v469 = vrot.slane %v468, 1
        %v470 = vadd.f32 %v468, %v469
        %v471 = vsel %vm214, %v426, 0.0
        %v472 = vsel %vm214, %v427, 0.0
        %v473 = vadd.f32 %v471, %v472
        %v474 = vrot.slane %v473, 4
        %v475 = vadd.f32 %v473, %v474
        %v476 = vrot.slane %v475, 2
        %v477 = vadd.f32 %v475, %v476
        %v478 = vrot.slane %v477, 1
        %v479 = vadd.f32 %v477, %v478
        %v480 = vsel %vm214, %v428, 0.0
        %v481 = vsel %vm214, %v429, 0.0
        %v482 = vadd.f32 %v480, %v481
        %v483 = vrot.slane %v482, 4
        %v484 = vadd.f32 %v482, %v483
        %v485 = vrot.slane %v484, 2
        %v486 = vadd.f32 %v484, %v485
        %v487 = vrot.slane %v486, 1
        %v488 = vadd.f32 %v486, %v487
        %v489 = vsel %vm214, %v430, 0.0
        %v490 = vsel %vm214, %v431, 0.0
        %v491 = vadd.f32 %v489, %v490
        %v492 = vrot.slane %v491, 4
        %v493 = vadd.f32 %v491, %v492
        %v494 = vrot.slane %v493, 2
        %v495 = vadd.f32 %v493, %v494
        %v496 = vrot.slane %v495, 1
        %v497 = vadd.f32 %v495, %v496
        %v498 = vsel %vm214, %v432, 0.0
        %v499 = vsel %vm214, %v433, 0.0
        %v500 = vadd.f32 %v498, %v499
        %v501 = vrot.slane %v500, 4
        %v502 = vadd.f32 %v500, %v501
        %v503 = vrot.slane %v502, 2
        %v504 = vadd.f32 %v502, %v503
        %v505 = vrot.slane %v504, 1
        %v506 = vadd.f32 %v504, %v505
        %vm515 = vcmask 1041409
        %v516 = vsel %vm515, %v452, %v443
        %vm517 = vcmask 1042434
        %v518 = vsel %vm517, %v461, %v516
        %vm519 = vcmask 1043459
        %v520 = vsel %vm519, %v470, %v518
        %vm521 = vcmask 1044484
        %v522 = vsel %vm521, %v479, %v520
        %vm523 = vcmask 1045509
        %v524 = vsel %vm523, %v488, %v522
        %vm525 = vcmask 1046534
        %v526 = vsel %vm525, %v497, %v524
        %vm527 = vcmask 1047559
        %v528 = vsel %vm527, %v506, %v526
        %v530 = vadd.f32 %v434, %v528
        %531 = vst.msk [vmem:[#allocation2] sm:$0xff] %vm214, %v530
        %v532 = vld [vmem:[#allocation2] sm:$0xff]
        %v533 = vmul.f32 %v532, 0.0625
        %534 = vst.msk [vmem:[%s204] sm:$0xff] %vm214, %v533
        %s535 = sand.u32 %s97, 1
        %s536 = scalar_lea.sflag [#allocation5], %s535
        %s537 = sand.u32 %s97, 1
        %s538 = smul.addr %s537, 8
        %s539 = scalar_lea.vmem [#allocation8], %s538
        // Predicated region
        $region41: #{tpu_custom_call.1} parent=31 // pred_check
          %p540 = pneg %p107
        $region42: #{tpu_custom_call.1} parent=31 // pred_check_branch
          %542 = sbr.rel (%p540) target = $region44
        $region43: #{tpu_custom_call.1} parent=31 // pred_region
          %s544 = ssub.s32 128, 128
          %545 = vsyncadd %s536, %s544
          %s546 = smul.addr %s21, 128
          %s547 = scalar_lea.hbm %s3, %s546
          %s549 = sshll.u32 %s539, 4
          %s550 = int_to_ptr.vmem [resolvable:$true] %s549
          %552 = dma.vmem_to_hbm [thread:$0]  %s550, 128, %s547, %s536
        $region44: #{tpu_custom_call.1} parent=31 // pred_fallthru
          _
      $region32: #{tpu_custom_call.1} parent=5 // pred_fallthru
        _
      %p553 = scmp.le.s32.totalorder 2, %s16
      // Predicated region
      $region45: #{tpu_custom_call.1} parent=5 // pred_check
        %p554 = pneg %p553
      $region46: #{tpu_custom_call.1} parent=5 // pred_check_branch
        %556 = sbr.rel (%p554) target = $region48
      $region47: #{tpu_custom_call.1} parent=5 // pred_region
        %s557 = ssub.s32 %s16, 2
        // Predicated region
        $region49: #{tpu_custom_call.1} parent=47 // pred_check
          %p558 = pneg %p113
        $region50: #{tpu_custom_call.1} parent=47 // pred_check_branch
          %560 = sbr.rel (%p558) target = $region52
        $region51: #{tpu_custom_call.1} parent=47 // pred_region
          %s561 = sand.u32 %s98, 1
          %s562 = scalar_lea.sflag [#allocation5], %s561
          %s563 = sand.u32 %s98, 1
          %s564 = smul.addr %s563, 8
          %s565 = scalar_lea.vmem [#allocation8], %s564
          %566 = dma.done %s562, 128
        $region52: #{tpu_custom_call.1} parent=47 // pred_fallthru
          _
      $region48: #{tpu_custom_call.1} parent=5 // pred_fallthru
        _
    $region6: #{tpu_custom_call.1} parent=1 // loop_footer
      %s20 = sadd.s32 1, %s16
    $region7: #{tpu_custom_call.1} parent=1 // loop_footer_branch
      %15 = sbr.rel target = $region3
    $region8: #{tpu_custom_call.1} parent=1 // loop_exit
      _
    %567 = vsyncpa [#allocation4], 1
    %s568 = scalar_lea.sflag [#allocation4], 1
    %569 = vsyncpa %s568, 1
    %570 = vsyncpa [#allocation7], 1
    %571 = vsyncpa [#allocation5], 1
    %s572 = scalar_lea.sflag [#allocation5], 1
    %573 = vsyncpa %s572, 1

</llo_original>
